<compile_context>
chip_gen: v5e
topology: v5e:2x2
jax: 0.10.0
libtpu: 0.0.40
codegen_flags: <defaults>
</compile_context>

<pallas_src>
import functools

import jax
import jax.numpy as jnp
from jax.experimental import pallas as pl
from jax.experimental.pallas import tpu as pltpu


_MASK_VALUE = -1e30   # large finite negative (safer than -inf for masked rows)


def _default_vmem_limit_bytes():
    """~75% of physical VMEM, capped at 100 MiB (96 MiB on v5e/v6e, 48 MiB on v7x)."""
    try:
        info = pltpu.get_tpu_info()
        cap = getattr(info, "vmem_capacity_bytes", None)
        if cap:
            return int(min(cap * 3 // 4, 100 * 1024 * 1024))
    except Exception:
        pass
    return 48 * 1024 * 1024


# ----------------------------- kernel 1 ------------------------------------


def _qkv_proj_kernel(x_ref, w_ref, b_ref, q_ref, k_ref, v_ref, *,
                     n_heads, head_dim, scale):
    """qkv = x @ W_qkv + b; writes Q*scale, K, V directly in (H, T, D) layout."""
    x = x_ref[0]                                               # (bs, C)
    acc = jnp.dot(x, w_ref[...], preferred_element_type=jnp.float32)
    acc = acc + b_ref[...].astype(jnp.float32)                 # (bs, 3C) f32
    c = n_heads * head_dim
    for h in range(n_heads):                                   # static unroll
        lo = h * head_dim
        q_ref[0, h] = (acc[:, lo:lo + head_dim] * scale).astype(q_ref.dtype)
        k_ref[0, h] = acc[:, c + lo:c + lo + head_dim].astype(k_ref.dtype)
        v_ref[0, h] = acc[:, 2 * c + lo:2 * c + lo + head_dim].astype(v_ref.dtype)


# ----------------------------- kernel 2 ------------------------------------


def _flash_attn_proj_kernel(qmap_ref, kmap_ref,
                            q_ref, k_ref, v_ref, wp_ref, bp_ref,
                            o_ref,
                            m_sc, l_sc, acc_sc, attn_sc, *,
                            n_heads, head_dim, block_q, block_k):
    """One causal (q-tile, k-tile) step over all heads, online softmax,
    with the full-depth output projection fused at the end of each q row."""
    step = pl.program_id(1)
    qi = qmap_ref[step]
    ki = kmap_ref[step]

    row_start = ki == 0
    last_ki = ((qi + 1) * block_q - 1) // block_k          # last causal k-tile
    row_end = ki == last_ki
    # tile contains some future (k > q) positions only near the diagonal
    needs_mask = ki * block_k + block_k - 1 > qi * block_q

    # ---- per-(batch, q-row) online-softmax state init ----
    @pl.when(row_start)
    def _():
        m_sc[...] = jnp.full(m_sc.shape, _MASK_VALUE, m_sc.dtype)
        l_sc[...] = jnp.zeros(l_sc.shape, l_sc.dtype)
        acc_sc[...] = jnp.zeros(acc_sc.shape, acc_sc.dtype)

    def update(masked):
        if masked:
            q_pos = qi * block_q + jax.lax.broadcasted_iota(
                jnp.int32, (block_q, block_k), 0)
            k_pos = ki * block_k + jax.lax.broadcasted_iota(
                jnp.int32, (block_q, block_k), 1)
            mask = q_pos >= k_pos
        for h in range(n_heads):                            # static unroll
            q = q_ref[0, h]                                 # (bq, D), pre-scaled
            k = k_ref[0, h]                                 # (bk, D)
            v = v_ref[0, h]                                 # (bk, D)
            s = jax.lax.dot_general(q, k, (((1,), (1,)), ((), ())),
                                    preferred_element_type=jnp.float32)
            if masked:
                s = jnp.where(mask, s, _MASK_VALUE)
            m_prev = m_sc[h]
            m_new = jnp.maximum(m_prev, jnp.max(s, axis=-1, keepdims=True))
            alpha = jnp.exp(m_prev - m_new)
            p = jnp.exp(s - m_new)
            l_sc[h] = alpha * l_sc[h] + jnp.sum(p, axis=-1, keepdims=True)
            acc_sc[h] = alpha * acc_sc[h] + jax.lax.dot_general(
                p.astype(v.dtype), v, (((1,), (0,)), ((), ())),
                preferred_element_type=jnp.float32)
            m_sc[h] = m_new

    # mask math only on (partially masked) diagonal tiles
    @pl.when(needs_mask)
    def _():
        update(True)

    @pl.when(jnp.logical_not(needs_mask))
    def _():
        update(False)

    # ---- end of this q row: normalize, assemble heads, project once ----
    @pl.when(row_end)
    def _():
        for h in range(n_heads):                            # static unroll
            lo = h * head_dim
            inv_l = pl.reciprocal(l_sc[h], approx=True)     # (bq, 1)
            attn_sc[:, lo:lo + head_dim] = (acc_sc[h] * inv_l).astype(attn_sc.dtype)
        out = jax.lax.dot_general(attn_sc[...], wp_ref[...],
                                  (((1,), (0,)), ((), ())),
                                  preferred_element_type=jnp.float32)
        o_ref[0] = (out + bp_ref[...].astype(jnp.float32)).astype(o_ref.dtype)


# ------------------------------ wrapper ------------------------------------


def gpt2_self_attention(x, w_qkv, b_qkv, w_proj, b_proj, *, n_heads,
                        block_q=256, block_k=512, block_seq=512,
                        vmem_limit_bytes=None):
    """Forward pass of GPT2SelfAttention (eval mode).

    x: (B, T, C); w_qkv: (C, 3C); b_qkv: (1, 3C); w_proj: (C, C); b_proj: (1, C).
    Weights are math-layout: y = x @ W + b (== PyTorch x @ weight.T + bias).
    For best TPU throughput pass x (and weights) as bf16; accumulation is f32.
    """
    b, t, c = x.shape
    assert c % n_heads == 0, "embed_dim must be divisible by num_heads"
    d = c // n_heads
    scale = float(d) ** -0.5

    # weights in the activation dtype (bf16 recommended); f32 accum in-kernel
    w_qkv = w_qkv.astype(x.dtype)
    b_qkv = b_qkv.astype(x.dtype)
    w_proj = w_proj.astype(x.dtype)
    b_proj = b_proj.astype(x.dtype)

    # pad T so blocks tile it exactly; padded keys are masked by causality,
    # padded query rows are sliced off at the end.
    pad_unit = 128 if t > 128 else 8
    t_pad = -(-t // pad_unit) * pad_unit

    def pick(req):
        blk = max(8, min(req, t_pad))
        blk -= blk % 8
        while t_pad % blk:
            blk -= 8
        return blk

    bq, bk, bs = pick(block_q), pick(block_k), pick(block_seq)

    x_p = x if t_pad == t else jnp.pad(x, ((0, 0), (0, t_pad - t), (0, 0)))

    vmem_limit = (vmem_limit_bytes if vmem_limit_bytes is not None
                  else _default_vmem_limit_bytes())

    # ---------------- kernel 1: fused QKV projection -> (B, H, T, D) --------
    q, k, v = pl.pallas_call(
        functools.partial(_qkv_proj_kernel, n_heads=n_heads, head_dim=d,
                          scale=scale),
        out_shape=[jax.ShapeDtypeStruct((b, n_heads, t_pad, d), x.dtype)] * 3,
        grid_spec=pltpu.PrefetchScalarGridSpec(
            num_scalar_prefetch=0,
            grid=(b, t_pad // bs),
            in_specs=[
                pl.BlockSpec((1, bs, c), lambda bi, ti: (bi, ti, 0)),     # x
                pl.BlockSpec((c, 3 * c), lambda bi, ti: (0, 0)),          # w_qkv
                pl.BlockSpec((1, 3 * c), lambda bi, ti: (0, 0)),          # b_qkv
            ],
            out_specs=[pl.BlockSpec((1, n_heads, bs, d),
                                    lambda bi, ti: (bi, 0, ti, 0))] * 3,
        ),
        compiler_params=pltpu.CompilerParams(
            dimension_semantics=("parallel", "parallel"),
            vmem_limit_bytes=vmem_limit),
    )(x_p, w_qkv, b_qkv)

    # ------------- flattened lower-triangle causal tile schedule ------------
    qs, ks = [], []
    for qi in range(t_pad // bq):
        last_ki = ((qi + 1) * bq - 1) // bk
        for ki in range(last_ki + 1):
            qs.append(qi)
            ks.append(ki)
    qmap = jnp.asarray(qs, dtype=jnp.int32)
    kmap = jnp.asarray(ks, dtype=jnp.int32)
    n_steps = len(qs)

    # ------- kernel 2: flash attention + fused output projection ------------
    out = pl.pallas_call(
        functools.partial(_flash_attn_proj_kernel, n_heads=n_heads,
                          head_dim=d, block_q=bq, block_k=bk),
        out_shape=jax.ShapeDtypeStruct((b, t_pad, c), x.dtype),
        grid_spec=pltpu.PrefetchScalarGridSpec(
            num_scalar_prefetch=2,
            grid=(b, n_steps),
            in_specs=[
                pl.BlockSpec((1, n_heads, bq, d),
                             lambda bi, s, qm, km: (bi, 0, qm[s], 0)),    # Q
                pl.BlockSpec((1, n_heads, bk, d),
                             lambda bi, s, qm, km: (bi, 0, km[s], 0)),    # K
                pl.BlockSpec((1, n_heads, bk, d),
                             lambda bi, s, qm, km: (bi, 0, km[s], 0)),    # V
                pl.BlockSpec((c, c), lambda bi, s, qm, km: (0, 0)),       # w_proj
                pl.BlockSpec((1, c), lambda bi, s, qm, km: (0, 0)),       # b_proj
            ],
            out_specs=pl.BlockSpec((1, bq, c),
                                   lambda bi, s, qm, km: (bi, qm[s], 0)),
            scratch_shapes=[
                pltpu.VMEM((n_heads, bq, 1), jnp.float32),   # m: running max
                pltpu.VMEM((n_heads, bq, 1), jnp.float32),   # l: running denom
                pltpu.VMEM((n_heads, bq, d), jnp.float32),   # per-head attn acc
                pltpu.VMEM((bq, c), x.dtype),                # assembled heads
            ],
        ),
        compiler_params=pltpu.CompilerParams(
            dimension_semantics=("parallel", "arbitrary"),
            vmem_limit_bytes=vmem_limit),
    )(qmap, kmap, q, k, v, w_proj, b_proj)

    if t_pad != t:
        out = out[:, :t, :]
    return out


def reference_attention(x, w_qkv, b_qkv, w_proj, b_proj, *, n_heads):
    """Pure-JAX reference mirroring the PyTorch forward (eval mode)."""
    b, t, c = x.shape
    d = c // n_heads
    qkv = x @ w_qkv + b_qkv
    q, k, v = jnp.split(qkv, 3, axis=-1)

    def heads(z):
        return z.reshape(b, t, n_heads, d).transpose(0, 2, 1, 3)

    q, k, v = heads(q), heads(k), heads(v)
    s = (q @ jnp.swapaxes(k, -2, -1)) * d ** (-0.5)
    mask = jnp.tril(jnp.ones((t, t), dtype=bool))
    s = jnp.where(mask[None, None], s, -jnp.inf)
    w = jax.nn.softmax(s, axis=-1)
    a = (w @ v).transpose(0, 2, 1, 3).reshape(b, t, c)
    return a @ w_proj + b_proj


if __name__ == "__main__":
    # Small config: batch=2, seq_len=8, embed_dim=32, num_heads=4 (head_size=8)
    B, T, C, NH = 2, 8, 32, 4

    key = jax.random.PRNGKey(0)
    kx, kw1, kb1, kw2, kb2 = jax.random.split(key, 5)

    x = jax.random.normal(kx, (B, T, C), dtype=jnp.float32)
    w_qkv = jax.random.normal(kw1, (C, 3 * C), dtype=jnp.float32) * 0.02
    b_qkv = jax.random.normal(kb1, (1, 3 * C), dtype=jnp.float32) * 0.02
    w_proj = jax.random.normal(kw2, (C, C), dtype=jnp.float32) * 0.02
    b_proj = jax.random.normal(kb2, (1, C), dtype=jnp.float32) * 0.02

    ref = reference_attention(x, w_qkv, b_qkv, w_proj, b_proj, n_heads=NH)

    # f32 path: tight check against the reference.
    out = gpt2_self_attention(x, w_qkv, b_qkv, w_proj, b_proj, n_heads=NH)
    out = jax.block_until_ready(out)
    assert out.shape == (B, T, C)
    max_err = float(jnp.max(jnp.abs(out - ref)))
    # tolerance accounts for pl.reciprocal(approx=True) in the softmax denom
    assert jnp.allclose(out, ref, atol=2e-3, rtol=2e-3), (
        f"f32 mismatch vs reference: max |diff| = {max_err}")

    # bf16 path (recommended for production: MXU-native operands, f32 accum).
    out_bf16 = gpt2_self_attention(x.astype(jnp.bfloat16), w_qkv, b_qkv,
                                   w_proj, b_proj, n_heads=NH)
    out_bf16 = jax.block_until_ready(out_bf16).astype(jnp.float32)
    assert out_bf16.shape == (B, T, C)
    assert bool(jnp.all(jnp.isfinite(out_bf16)))
    bf16_err = float(jnp.max(jnp.abs(out_bf16 - ref)))
    assert bf16_err < 0.05, f"bf16 path diverged: max |diff| = {bf16_err}"

    print("KERNEL_OK")
</pallas_src>

<mosaic_0001>
module attributes {stable_mosaic.version = 11 : i64} {
  func.func @_qkv_proj_kernel(%arg0: i32, %arg1: i32, %arg2: memref<1x8x32xf32, #tpu.memory_space<vmem>>, %arg3: memref<32x96xf32, #tpu.memory_space<vmem>>, %arg4: memref<1x96xf32, #tpu.memory_space<vmem>>, %arg5: memref<1x4x8x8xf32, #tpu.memory_space<vmem>>, %arg6: memref<1x4x8x8xf32, #tpu.memory_space<vmem>>, %arg7: memref<1x4x8x8xf32, #tpu.memory_space<vmem>>) attributes {dimension_semantics = [#tpu.dimension_semantics<parallel>, #tpu.dimension_semantics<parallel>], iteration_bounds = array<i64: 2, 1>, scalar_prefetch = 0 : i64, scratch_operands = 0 : i64, tpu.core_type = #tpu.core_type<tc>, window_params = [{transform_indices = @transform_0, window_bounds = array<i64: 1, 8, 32>}, {pipeline_mode = #tpu.pipeline_mode<synchronous>, transform_indices = @transform_1, window_bounds = array<i64: 32, 96>}, {pipeline_mode = #tpu.pipeline_mode<synchronous>, transform_indices = @transform_2, window_bounds = array<i64: 1, 96>}, {transform_indices = @transform_3, window_bounds = array<i64: 1, 4, 8, 8>}, {transform_indices = @transform_4, window_bounds = array<i64: 1, 4, 8, 8>}, {transform_indices = @transform_5, window_bounds = array<i64: 1, 4, 8, 8>}]} {
    %c0 = arith.constant 0 : index
    %c0_0 = arith.constant 0 : index
    %c0_1 = arith.constant 0 : index
    %0 = vector.load %arg2[%c0, %c0_0, %c0_1] : memref<1x8x32xf32, #tpu.memory_space<vmem>>, vector<1x8x32xf32>
    %1 = vector.shape_cast %0 : vector<1x8x32xf32> to vector<8x32xf32>
    %c0_2 = arith.constant 0 : index
    %c0_3 = arith.constant 0 : index
    %2 = vector.load %arg3[%c0_2, %c0_3] : memref<32x96xf32, #tpu.memory_space<vmem>>, vector<32x96xf32>
    %cst = arith.constant dense<0.000000e+00> : vector<8x96xf32>
    %3 = tpu.matmul %1, %2, %cst {dimension_numbers = #tpu.dot_dimension_numbers<[1], [0], [0], [1], [0, 0, 1, 1], [], []>} : vector<8x32xf32>, vector<32x96xf32>, vector<8x96xf32> -> vector<8x96xf32>
    %c0_4 = arith.constant 0 : index
    %c0_5 = arith.constant 0 : index
    %4 = vector.load %arg4[%c0_4, %c0_5] : memref<1x96xf32, #tpu.memory_space<vmem>>, vector<1x96xf32>
    %5 = vector.broadcast %4 : vector<1x96xf32> to vector<8x96xf32>
    %6 = arith.addf %3, %5 : vector<8x96xf32>
    %7 = vector.extract_strided_slice %6 {offsets = [0, 0], sizes = [8, 8], strides = [1, 1]} : vector<8x96xf32> to vector<8x8xf32>
    %cst_6 = arith.constant 0.353553385 : f32
    %8 = vector.broadcast %cst_6 : f32 to vector<8x8xf32>
    %9 = arith.mulf %7, %8 : vector<8x8xf32>
    %c0_7 = arith.constant 0 : index
    %c0_8 = arith.constant 0 : index
    %c0_9 = arith.constant 0 : index
    %c0_10 = arith.constant 0 : index
    %10 = vector.load %arg5[%c0_7, %c0_8, %c0_9, %c0_10] : memref<1x4x8x8xf32, #tpu.memory_space<vmem>>, vector<1x1x8x8xf32>
    %11 = vector.shape_cast %10 : vector<1x1x8x8xf32> to vector<8x8xf32>
    %12 = vector.shape_cast %9 : vector<8x8xf32> to vector<1x1x8x8xf32>
    tpu.vector_store %arg5[%c0_7, %c0_8, %c0_9, %c0_10], %12 {strides = array<i32>} : memref<1x4x8x8xf32, #tpu.memory_space<vmem>>, vector<1x1x8x8xf32>,
    %13 = vector.extract_strided_slice %6 {offsets = [0, 32], sizes = [8, 8], strides = [1, 1]} : vector<8x96xf32> to vector<8x8xf32>
    %c0_11 = arith.constant 0 : index
    %c0_12 = arith.constant 0 : index
    %c0_13 = arith.constant 0 : index
    %c0_14 = arith.constant 0 : index
    %14 = vector.load %arg6[%c0_11, %c0_12, %c0_13, %c0_14] : memref<1x4x8x8xf32, #tpu.memory_space<vmem>>, vector<1x1x8x8xf32>
    %15 = vector.shape_cast %14 : vector<1x1x8x8xf32> to vector<8x8xf32>
    %16 = vector.shape_cast %13 : vector<8x8xf32> to vector<1x1x8x8xf32>
    tpu.vector_store %arg6[%c0_11, %c0_12, %c0_13, %c0_14], %16 {strides = array<i32>} : memref<1x4x8x8xf32, #tpu.memory_space<vmem>>, vector<1x1x8x8xf32>,
    %17 = vector.extract_strided_slice %6 {offsets = [0, 64], sizes = [8, 8], strides = [1, 1]} : vector<8x96xf32> to vector<8x8xf32>
    %c0_15 = arith.constant 0 : index
    %c0_16 = arith.constant 0 : index
    %c0_17 = arith.constant 0 : index
    %c0_18 = arith.constant 0 : index
    %18 = vector.load %arg7[%c0_15, %c0_16, %c0_17, %c0_18] : memref<1x4x8x8xf32, #tpu.memory_space<vmem>>, vector<1x1x8x8xf32>
    %19 = vector.shape_cast %18 : vector<1x1x8x8xf32> to vector<8x8xf32>
    %20 = vector.shape_cast %17 : vector<8x8xf32> to vector<1x1x8x8xf32>
    tpu.vector_store %arg7[%c0_15, %c0_16, %c0_17, %c0_18], %20 {strides = array<i32>} : memref<1x4x8x8xf32, #tpu.memory_space<vmem>>, vector<1x1x8x8xf32>,
    %21 = vector.extract_strided_slice %6 {offsets = [0, 8], sizes = [8, 8], strides = [1, 1]} : vector<8x96xf32> to vector<8x8xf32>
    %cst_19 = arith.constant 0.353553385 : f32
    %22 = vector.broadcast %cst_19 : f32 to vector<8x8xf32>
    %23 = arith.mulf %21, %22 : vector<8x8xf32>
    %c0_20 = arith.constant 0 : index
    %c1 = arith.constant 1 : index
    %c0_21 = arith.constant 0 : index
    %c0_22 = arith.constant 0 : index
    %24 = vector.load %arg5[%c0_20, %c1, %c0_21, %c0_22] : memref<1x4x8x8xf32, #tpu.memory_space<vmem>>, vector<1x1x8x8xf32>
    %25 = vector.shape_cast %24 : vector<1x1x8x8xf32> to vector<8x8xf32>
    %26 = vector.shape_cast %23 : vector<8x8xf32> to vector<1x1x8x8xf32>
    tpu.vector_store %arg5[%c0_20, %c1, %c0_21, %c0_22], %26 {strides = array<i32>} : memref<1x4x8x8xf32, #tpu.memory_space<vmem>>, vector<1x1x8x8xf32>,
    %27 = vector.extract_strided_slice %6 {offsets = [0, 40], sizes = [8, 8], strides = [1, 1]} : vector<8x96xf32> to vector<8x8xf32>
    %c0_23 = arith.constant 0 : index
    %c1_24 = arith.constant 1 : index
    %c0_25 = arith.constant 0 : index
    %c0_26 = arith.constant 0 : index
    %28 = vector.load %arg6[%c0_23, %c1_24, %c0_25, %c0_26] : memref<1x4x8x8xf32, #tpu.memory_space<vmem>>, vector<1x1x8x8xf32>
    %29 = vector.shape_cast %28 : vector<1x1x8x8xf32> to vector<8x8xf32>
    %30 = vector.shape_cast %27 : vector<8x8xf32> to vector<1x1x8x8xf32>
    tpu.vector_store %arg6[%c0_23, %c1_24, %c0_25, %c0_26], %30 {strides = array<i32>} : memref<1x4x8x8xf32, #tpu.memory_space<vmem>>, vector<1x1x8x8xf32>,
    %31 = vector.extract_strided_slice %6 {offsets = [0, 72], sizes = [8, 8], strides = [1, 1]} : vector<8x96xf32> to vector<8x8xf32>
    %c0_27 = arith.constant 0 : index
    %c1_28 = arith.constant 1 : index
    %c0_29 = arith.constant 0 : index
    %c0_30 = arith.constant 0 : index
    %32 = vector.load %arg7[%c0_27, %c1_28, %c0_29, %c0_30] : memref<1x4x8x8xf32, #tpu.memory_space<vmem>>, vector<1x1x8x8xf32>
    %33 = vector.shape_cast %32 : vector<1x1x8x8xf32> to vector<8x8xf32>
    %34 = vector.shape_cast %31 : vector<8x8xf32> to vector<1x1x8x8xf32>
    tpu.vector_store %arg7[%c0_27, %c1_28, %c0_29, %c0_30], %34 {strides = array<i32>} : memref<1x4x8x8xf32, #tpu.memory_space<vmem>>, vector<1x1x8x8xf32>,
    %35 = vector.extract_strided_slice %6 {offsets = [0, 16], sizes = [8, 8], strides = [1, 1]} : vector<8x96xf32> to vector<8x8xf32>
    %cst_31 = arith.constant 0.353553385 : f32
    %36 = vector.broadcast %cst_31 : f32 to vector<8x8xf32>
    %37 = arith.mulf %35, %36 : vector<8x8xf32>
    %c0_32 = arith.constant 0 : index
    %c2 = arith.constant 2 : index
    %c0_33 = arith.constant 0 : index
    %c0_34 = arith.constant 0 : index
    %38 = vector.load %arg5[%c0_32, %c2, %c0_33, %c0_34] : memref<1x4x8x8xf32, #tpu.memory_space<vmem>>, vector<1x1x8x8xf32>
    %39 = vector.shape_cast %38 : vector<1x1x8x8xf32> to vector<8x8xf32>
    %40 = vector.shape_cast %37 : vector<8x8xf32> to vector<1x1x8x8xf32>
    tpu.vector_store %arg5[%c0_32, %c2, %c0_33, %c0_34], %40 {strides = array<i32>} : memref<1x4x8x8xf32, #tpu.memory_space<vmem>>, vector<1x1x8x8xf32>,
    %41 = vector.extract_strided_slice %6 {offsets = [0, 48], sizes = [8, 8], strides = [1, 1]} : vector<8x96xf32> to vector<8x8xf32>
    %c0_35 = arith.constant 0 : index
    %c2_36 = arith.constant 2 : index
    %c0_37 = arith.constant 0 : index
    %c0_38 = arith.constant 0 : index
    %42 = vector.load %arg6[%c0_35, %c2_36, %c0_37, %c0_38] : memref<1x4x8x8xf32, #tpu.memory_space<vmem>>, vector<1x1x8x8xf32>
    %43 = vector.shape_cast %42 : vector<1x1x8x8xf32> to vector<8x8xf32>
    %44 = vector.shape_cast %41 : vector<8x8xf32> to vector<1x1x8x8xf32>
    tpu.vector_store %arg6[%c0_35, %c2_36, %c0_37, %c0_38], %44 {strides = array<i32>} : memref<1x4x8x8xf32, #tpu.memory_space<vmem>>, vector<1x1x8x8xf32>,
    %45 = vector.extract_strided_slice %6 {offsets = [0, 80], sizes = [8, 8], strides = [1, 1]} : vector<8x96xf32> to vector<8x8xf32>
    %c0_39 = arith.constant 0 : index
    %c2_40 = arith.constant 2 : index
    %c0_41 = arith.constant 0 : index
    %c0_42 = arith.constant 0 : index
    %46 = vector.load %arg7[%c0_39, %c2_40, %c0_41, %c0_42] : memref<1x4x8x8xf32, #tpu.memory_space<vmem>>, vector<1x1x8x8xf32>
    %47 = vector.shape_cast %46 : vector<1x1x8x8xf32> to vector<8x8xf32>
    %48 = vector.shape_cast %45 : vector<8x8xf32> to vector<1x1x8x8xf32>
    tpu.vector_store %arg7[%c0_39, %c2_40, %c0_41, %c0_42], %48 {strides = array<i32>} : memref<1x4x8x8xf32, #tpu.memory_space<vmem>>, vector<1x1x8x8xf32>,
    %49 = vector.extract_strided_slice %6 {offsets = [0, 24], sizes = [8, 8], strides = [1, 1]} : vector<8x96xf32> to vector<8x8xf32>
    %cst_43 = arith.constant 0.353553385 : f32
    %50 = vector.broadcast %cst_43 : f32 to vector<8x8xf32>
    %51 = arith.mulf %49, %50 : vector<8x8xf32>
    %c0_44 = arith.constant 0 : index
    %c3 = arith.constant 3 : index
    %c0_45 = arith.constant 0 : index
    %c0_46 = arith.constant 0 : index
    %52 = vector.load %arg5[%c0_44, %c3, %c0_45, %c0_46] : memref<1x4x8x8xf32, #tpu.memory_space<vmem>>, vector<1x1x8x8xf32>
    %53 = vector.shape_cast %52 : vector<1x1x8x8xf32> to vector<8x8xf32>
    %54 = vector.shape_cast %51 : vector<8x8xf32> to vector<1x1x8x8xf32>
    tpu.vector_store %arg5[%c0_44, %c3, %c0_45, %c0_46], %54 {strides = array<i32>} : memref<1x4x8x8xf32, #tpu.memory_space<vmem>>, vector<1x1x8x8xf32>,
    %55 = vector.extract_strided_slice %6 {offsets = [0, 56], sizes = [8, 8], strides = [1, 1]} : vector<8x96xf32> to vector<8x8xf32>
    %c0_47 = arith.constant 0 : index
    %c3_48 = arith.constant 3 : index
    %c0_49 = arith.constant 0 : index
    %c0_50 = arith.constant 0 : index
    %56 = vector.load %arg6[%c0_47, %c3_48, %c0_49, %c0_50] : memref<1x4x8x8xf32, #tpu.memory_space<vmem>>, vector<1x1x8x8xf32>
    %57 = vector.shape_cast %56 : vector<1x1x8x8xf32> to vector<8x8xf32>
    %58 = vector.shape_cast %55 : vector<8x8xf32> to vector<1x1x8x8xf32>
    tpu.vector_store %arg6[%c0_47, %c3_48, %c0_49, %c0_50], %58 {strides = array<i32>} : memref<1x4x8x8xf32, #tpu.memory_space<vmem>>, vector<1x1x8x8xf32>,
    %59 = vector.extract_strided_slice %6 {offsets = [0, 88], sizes = [8, 8], strides = [1, 1]} : vector<8x96xf32> to vector<8x8xf32>
    %c0_51 = arith.constant 0 : index
    %c3_52 = arith.constant 3 : index
    %c0_53 = arith.constant 0 : index
    %c0_54 = arith.constant 0 : index
    %60 = vector.load %arg7[%c0_51, %c3_52, %c0_53, %c0_54] : memref<1x4x8x8xf32, #tpu.memory_space<vmem>>, vector<1x1x8x8xf32>
    %61 = vector.shape_cast %60 : vector<1x1x8x8xf32> to vector<8x8xf32>
    %62 = vector.shape_cast %59 : vector<8x8xf32> to vector<1x1x8x8xf32>
    tpu.vector_store %arg7[%c0_51, %c3_52, %c0_53, %c0_54], %62 {strides = array<i32>} : memref<1x4x8x8xf32, #tpu.memory_space<vmem>>, vector<1x1x8x8xf32>,
    return
  }
  func.func @transform_0(%arg0: i32, %arg1: i32) -> (i32, i32, i32) {
    %c0_i32 = arith.constant 0 : i32
    %c0_i32_0 = arith.constant 0 : i32
    return %arg0, %arg1, %c0_i32 : i32, i32, i32
  }
  func.func @transform_1(%arg0: i32, %arg1: i32) -> (i32, i32) {
    %c0_i32 = arith.constant 0 : i32
    %c0_i32_0 = arith.constant 0 : i32
    %c0_i32_1 = arith.constant 0 : i32
    return %c0_i32, %c0_i32_0 : i32, i32
  }
  func.func @transform_2(%arg0: i32, %arg1: i32) -> (i32, i32) {
    %c0_i32 = arith.constant 0 : i32
    %c0_i32_0 = arith.constant 0 : i32
    %c0_i32_1 = arith.constant 0 : i32
    return %c0_i32, %c0_i32_0 : i32, i32
  }
  func.func @transform_3(%arg0: i32, %arg1: i32) -> (i32, i32, i32, i32) {
    %c0_i32 = arith.constant 0 : i32
    %c0_i32_0 = arith.constant 0 : i32
    %c0_i32_1 = arith.constant 0 : i32
    return %arg0, %c0_i32, %arg1, %c0_i32_0 : i32, i32, i32, i32
  }
  func.func @transform_4(%arg0: i32, %arg1: i32) -> (i32, i32, i32, i32) {
    %c0_i32 = arith.constant 0 : i32
    %c0_i32_0 = arith.constant 0 : i32
    %c0_i32_1 = arith.constant 0 : i32
    return %arg0, %c0_i32, %arg1, %c0_i32_0 : i32, i32, i32, i32
  }
  func.func @transform_5(%arg0: i32, %arg1: i32) -> (i32, i32, i32, i32) {
    %c0_i32 = arith.constant 0 : i32
    %c0_i32_0 = arith.constant 0 : i32
    %c0_i32_1 = arith.constant 0 : i32
    return %arg0, %c0_i32, %arg1, %c0_i32_0 : i32, i32, i32, i32
  }
}

</mosaic_0001>

<llo_original>
// kernel: tpu_custom_call.1
$region0: #{tpu_custom_call.1}
  #allocation0 [shape = 'u32[]', space=smem, size = 0x4, offset = 0x4, fixed_abs, tag = 'smem constant byte address 0x4 - core index']
  #allocation1 [shape = 'u32[72,128]{1,0:T(1,128)}', space=vmem, size = 0x9000, scoped, tag = 'internal scratch']
  %s0 = inlined_call_operand.hbm [shape: f32[2,8,32], index: 0, kind: input, shape index: {}]
  %s1 = inlined_call_operand.hbm [shape: f32[32,96], index: 1, kind: input, shape index: {}]
  %s2 = inlined_call_operand.vmem [shape: f32[1,96], index: 2, kind: input, shape index: {}]
  %s3 = inlined_call_operand.hbm [shape: f32[2,4,8,8], index: 3, kind: output, shape index: {0}]
  %s4 = inlined_call_operand.hbm [shape: f32[2,4,8,8], index: 4, kind: output, shape index: {1}]
  %s5 = inlined_call_operand.hbm [shape: f32[2,4,8,8], index: 5, kind: output, shape index: {2}]
  %6 = xla_tuple %s3, %s4, %s5
  %s7 = sld [smem:[#allocation0]]
  $region69: #{tpu_custom_call.1} parent=0
    _
  %s9 = ssub.s32 1, %s7
  %s10 = scalar_select 0, %s9, %s7
  $region1: #{tpu_custom_call.1} parent=0
    #allocation2 [shape = 'u8[8192]{0}', space=vmem, size = 0x2000, scoped, tag = 'input window, operand 0']
    #allocation3 [shape = 's32[2]{0}', space=sflag, size = 0x8, scoped, tag = 'scoped memory for tpu_custom_call.1']
    #allocation4 [shape = 's32[2]{0}', space=sflag, size = 0x8, scoped, tag = 'scoped memory for tpu_custom_call.1']
    #allocation5 [shape = 'u8[16384]{0}', space=vmem, size = 0x4000, scoped, tag = 'input window, operand 1, single buffered']
    #allocation6 [shape = 's32[1]{0}', space=sflag, size = 0x4, scoped, tag = 'scoped memory for tpu_custom_call.1']
    #allocation7 [shape = 'u8[32768]{0}', space=vmem, size = 0x8000, scoped, tag = 'output window, operand 0']
    #allocation8 [shape = 'u8[32768]{0}', space=vmem, size = 0x8000, scoped, tag = 'output window, operand 1']
    #allocation9 [shape = 's32[2]{0}', space=sflag, size = 0x8, scoped, tag = 'scoped memory for tpu_custom_call.1']
    #allocation10 [shape = 'u8[32768]{0}', space=vmem, size = 0x8000, scoped, tag = 'output window, operand 2']
    %11 = vsyncpa [#allocation3], 0
    %s12 = scalar_lea.sflag [#allocation3], 1
    %13 = vsyncpa %s12, 0
    %14 = vsyncpa [#allocation6], 0
    %15 = vsyncpa [#allocation4], 0
    %s16 = scalar_lea.sflag [#allocation4], 1
    %17 = vsyncpa %s16, 0
    %18 = vsyncpa [#allocation9], 0
    %s19 = scalar_lea.sflag [#allocation9], 1
    %20 = vsyncpa %s19, 0
    loop: start=0, step=1, limit=4
    $region2: #{tpu_custom_call.1} parent=1 // loop_pre_header
      _
    $region3: #{tpu_custom_call.1} parent=1 // loop_header
      %s22 = sphi 0, %s26
      %p23 = scmp.ge.s32.totalorder %s22, 4
      %s29 = sphi 0, %s41
      %s30 = sphi 0, %s37
      %s31 = sphi 0, %s29
      %s32 = sphi 0, %s30
      %s33 = sphi 0, %s31
      %s34 = sphi 0, %s32
      %s46 = sphi 0, %s48
      %s49 = sphi 0, %s46
      %s50 = sphi 0, %s49
      %s66 = sphi 0, %s50
      %s70 = sphi 0, %s70
      %s72 = sphi 0, %s70
      %s73 = sphi 0, %s72
      %s87 = sphi 0, %s73
      %s91 = sphi 0, %s91
      %s93 = sphi 0, %s91
      %s94 = sphi 0, %s93
      %s108 = sphi 0, %s94
      %s116 = sphi 0, %s118
      %s119 = sphi 0, %s116
      %s120 = sphi 0, %s119
      %s136 = sphi 0, %s120
      %s144 = sphi 0, %s146
      %s147 = sphi 0, %s144
      %s148 = sphi 0, %s147
      %s164 = sphi 0, %s148
      %s172 = sphi 0, %s174
      %s175 = sphi 0, %s172
      %s176 = sphi 0, %s175
      %s192 = sphi 0, %s176
    $region4: #{tpu_custom_call.1} parent=1 // loop_header_branch
      %25 = sbr.rel (%p23) target = $region8
    $region5: #{tpu_custom_call.1} parent=1 // loop_body
      %s27 = ssub.s32 %s22, 1
      %s28 = ssub.s32 %s22, 2
      %s35 = sadd.s32 1, %s30
      %p36 = scmp.ge.s32.totalorder %s35, 1
      %s37 = scalar_select %p36, 0, %s35
      %s38 = sadd.s32 1, %s29
      %s39 = scalar_select %p36, %s38, %s29
      %p40 = scmp.ge.s32.totalorder %s39, 2
      %s41 = scalar_select %p40, 0, %s39
      %s42 = ssub.s32 %s29, %s41
      %s43 = ssub.s32 %s30, %s37
      %s44 = sor.u32 %s42, %s43
      %p45 = scmp.eq.s32.totalorder %s44, 0
      %s47 = sadd.s32 %s46, 1
      %s48 = scalar_select %p45, %s46, %s47
      %p51 = pneg %p45
      %p52 = scmp.eq.s32.totalorder %s22, 1
      %p53 = por %p51, %p52
      %p54 = scmp.ne.s32.totalorder %s46, %s49
      %p55 = scmp.eq.s32.totalorder %s22, 0
      %p56 = por %p54, %p55
      %p57 = scmp.ne.s32.totalorder %s46, %s49
      %p58 = scmp.eq.s32.totalorder %s27, 1
      %p59 = por %p57, %p58
      %p60 = scmp.ne.s32.totalorder %s49, %s50
      %p61 = scmp.eq.s32.totalorder %s27, 0
      %p62 = por %p60, %p61
      %p63 = scmp.ne.s32.totalorder %s49, %s50
      %p64 = scmp.eq.s32.totalorder %s28, 1
      %p65 = por %p63, %p64
      %p67 = scmp.ne.s32.totalorder %s50, %s66
      %p68 = scmp.eq.s32.totalorder %s28, 0
      %p69 = por %p67, %p68
      %s71 = sadd.s32 %s70, 1
      %p74 = scmp.eq.s32.totalorder %s22, 1
      %p75 = scmp.ne.s32.totalorder %s70, %s72
      %p76 = scmp.eq.s32.totalorder %s22, 0
      %p77 = por %p75, %p76
      %p78 = scmp.ne.s32.totalorder %s70, %s72
      %p79 = scmp.eq.s32.totalorder %s27, 1
      %p80 = por %p78, %p79
      %p81 = scmp.ne.s32.totalorder %s72, %s73
      %p82 = scmp.eq.s32.totalorder %s27, 0
      %p83 = por %p81, %p82
      %p84 = scmp.ne.s32.totalorder %s72, %s73
      %p85 = scmp.eq.s32.totalorder %s28, 1
      %p86 = por %p84, %p85
      %p88 = scmp.ne.s32.totalorder %s73, %s87
      %p89 = scmp.eq.s32.totalorder %s28, 0
      %p90 = por %p88, %p89
      %s92 = sadd.s32 %s91, 1
      %p95 = scmp.eq.s32.totalorder %s22, 1
      %p96 = scmp.ne.s32.totalorder %s91, %s93
      %p97 = scmp.eq.s32.totalorder %s22, 0
      %p98 = por %p96, %p97
      %p99 = scmp.ne.s32.totalorder %s91, %s93
      %p100 = scmp.eq.s32.totalorder %s27, 1
      %p101 = por %p99, %p100
      %p102 = scmp.ne.s32.totalorder %s93, %s94
      %p103 = scmp.eq.s32.totalorder %s27, 0
      %p104 = por %p102, %p103
      %p105 = scmp.ne.s32.totalorder %s93, %s94
      %p106 = scmp.eq.s32.totalorder %s28, 1
      %p107 = por %p105, %p106
      %p109 = scmp.ne.s32.totalorder %s94, %s108
      %p110 = scmp.eq.s32.totalorder %s28, 0
      %p111 = por %p109, %p110
      %s112 = ssub.s32 %s29, %s41
      %s113 = ssub.s32 %s30, %s37
      %s114 = sor.u32 %s112, %s113
      %p115 = scmp.eq.s32.totalorder %s114, 0
      %s117 = sadd.s32 %s116, 1
      %s118 = scalar_select %p115, %s116, %s117
      %p121 = pneg %p115
      %p122 = scmp.eq.s32.totalorder %s22, 1
      %p123 = por %p121, %p122
      %p124 = scmp.ne.s32.totalorder %s116, %s119
      %p125 = scmp.eq.s32.totalorder %s22, 0
      %p126 = por %p124, %p125
      %p127 = scmp.ne.s32.totalorder %s116, %s119
      %p128 = scmp.eq.s32.totalorder %s27, 1
      %p129 = por %p127, %p128
      %p130 = scmp.ne.s32.totalorder %s119, %s120
      %p131 = scmp.eq.s32.totalorder %s27, 0
      %p132 = por %p130, %p131
      %p133 = scmp.ne.s32.totalorder %s119, %s120
      %p134 = scmp.eq.s32.totalorder %s28, 1
      %p135 = por %p133, %p134
      %p137 = scmp.ne.s32.totalorder %s120, %s136
      %p138 = scmp.eq.s32.totalorder %s28, 0
      %p139 = por %p137, %p138
      %s140 = ssub.s32 %s29, %s41
      %s141 = ssub.s32 %s30, %s37
      %s142 = sor.u32 %s140, %s141
      %p143 = scmp.eq.s32.totalorder %s142, 0
      %s145 = sadd.s32 %s144, 1
      %s146 = scalar_select %p143, %s144, %s145
      %p149 = pneg %p143
      %p150 = scmp.eq.s32.totalorder %s22, 1
      %p151 = por %p149, %p150
      %p152 = scmp.ne.s32.totalorder %s144, %s147
      %p153 = scmp.eq.s32.totalorder %s22, 0
      %p154 = por %p152, %p153
      %p155 = scmp.ne.s32.totalorder %s144, %s147
      %p156 = scmp.eq.s32.totalorder %s27, 1
      %p157 = por %p155, %p156
      %p158 = scmp.ne.s32.totalorder %s147, %s148
      %p159 = scmp.eq.s32.totalorder %s27, 0
      %p160 = por %p158, %p159
      %p161 = scmp.ne.s32.totalorder %s147, %s148
      %p162 = scmp.eq.s32.totalorder %s28, 1
      %p163 = por %p161, %p162
      %p165 = scmp.ne.s32.totalorder %s148, %s164
      %p166 = scmp.eq.s32.totalorder %s28, 0
      %p167 = por %p165, %p166
      %s168 = ssub.s32 %s29, %s41
      %s169 = ssub.s32 %s30, %s37
      %s170 = sor.u32 %s168, %s169
      %p171 = scmp.eq.s32.totalorder %s170, 0
      %s173 = sadd.s32 %s172, 1
      %s174 = scalar_select %p171, %s172, %s173
      %p177 = pneg %p171
      %p178 = scmp.eq.s32.totalorder %s22, 1
      %p179 = por %p177, %p178
      %p180 = scmp.ne.s32.totalorder %s172, %s175
      %p181 = scmp.eq.s32.totalorder %s22, 0
      %p182 = por %p180, %p181
      %p183 = scmp.ne.s32.totalorder %s172, %s175
      %p184 = scmp.eq.s32.totalorder %s27, 1
      %p185 = por %p183, %p184
      %p186 = scmp.ne.s32.totalorder %s175, %s176
      %p187 = scmp.eq.s32.totalorder %s27, 0
      %p188 = por %p186, %p187
      %p189 = scmp.ne.s32.totalorder %s175, %s176
      %p190 = scmp.eq.s32.totalorder %s28, 1
      %p191 = por %p189, %p190
      %p193 = scmp.ne.s32.totalorder %s176, %s192
      %p194 = scmp.eq.s32.totalorder %s28, 0
      %p195 = por %p193, %p194
      %p196 = scmp.le.s32.totalorder 1, %s22
      %p197 = scmp.lt.s32.totalorder %s22, 3
      %p198 = pnand %p196, %p197
      %p199 = pneg %p198
      // Predicated region
      $region9: #{tpu_custom_call.1} parent=5 // pred_check
        _
      $region10: #{tpu_custom_call.1} parent=5 // pred_check_branch
        %201 = sbr.rel (%p198) target = $region12
      $region11: #{tpu_custom_call.1} parent=5 // pred_region
        %s202 = ssub.s32 %s22, 1
        // Predicated region
        $region13: #{tpu_custom_call.1} parent=11 // pred_check
          %p203 = pneg %p83
        $region14: #{tpu_custom_call.1} parent=11 // pred_check_branch
          %205 = sbr.rel (%p203) target = $region16
        $region15: #{tpu_custom_call.1} parent=11 // pred_region
          %207 = vsyncadd [#allocation6], 0
          %s208 = sshll.u32 %s1, 4
          %s209 = int_to_ptr.hbm [resolvable:$true] %s208
          %s210 = sshll.u32 [#allocation5], 4
          %s211 = int_to_ptr.vmem [resolvable:$true] %s210
          %216 = dma.hbm_to_vmem [thread:$0]  %s209, 512, %s211, [#allocation6], 128, 128, 8
        $region16: #{tpu_custom_call.1} parent=11 // pred_fallthru
          _
        // Predicated region
        $region17: #{tpu_custom_call.1} parent=11 // pred_check
          %p217 = pneg %p104
        $region18: #{tpu_custom_call.1} parent=11 // pred_check_branch
          %219 = sbr.rel (%p217) target = $region20
        $region19: #{tpu_custom_call.1} parent=11 // pred_region
          _
        $region20: #{tpu_custom_call.1} parent=11 // pred_fallthru
          _
      $region12: #{tpu_custom_call.1} parent=5 // pred_fallthru
        _
      %p220 = scmp.lt.s32.totalorder %s22, 2
      // Predicated region
      $region21: #{tpu_custom_call.1} parent=5 // pred_check
        %p221 = pneg %p220
      $region22: #{tpu_custom_call.1} parent=5 // pred_check_branch
        %223 = sbr.rel (%p221) target = $region24
      $region23: #{tpu_custom_call.1} parent=5 // pred_region
        // Predicated region
        $region25: #{tpu_custom_call.1} parent=23 // pred_check
          %p224 = pneg %p56
        $region26: #{tpu_custom_call.1} parent=23 // pred_check_branch
          %226 = sbr.rel (%p224) target = $region28
        $region27: #{tpu_custom_call.1} parent=23 // pred_region
          %s227 = sand.u32 %s46, 1
          %s228 = scalar_lea.sflag [#allocation3], %s227
          %s229 = sand.u32 %s46, 1
          %s230 = smul.addr %s229, 8
          %s231 = scalar_lea.vmem [#allocation2], %s230
          %233 = vsyncadd %s228, 0
          %s234 = sadd.s32 %s30, %s29
          %s235 = smul.addr %s234, 8
          %s236 = scalar_lea.hbm %s0, %s235
          %s238 = sshll.u32 %s236, 4
          %s239 = int_to_ptr.hbm [resolvable:$true] %s238
          %s240 = sshll.u32 %s231, 4
          %s241 = int_to_ptr.vmem [resolvable:$true] %s240
          %243 = dma.hbm_to_vmem [thread:$0]  %s239, 128, %s241, %s228
        $region28: #{tpu_custom_call.1} parent=23 // pred_fallthru
          _
      $region24: #{tpu_custom_call.1} parent=5 // pred_fallthru
        _
      %p244 = scmp.le.s32.totalorder 1, %s22
      %p245 = scmp.lt.s32.totalorder %s22, 3
      %p246 = pnand %p244, %p245
      %p247 = pneg %p246
      // Predicated region
      $region29: #{tpu_custom_call.1} parent=5 // pred_check
        _
      $region30: #{tpu_custom_call.1} parent=5 // pred_check_branch
        %249 = sbr.rel (%p246) target = $region32
      $region31: #{tpu_custom_call.1} parent=5 // pred_region
        %s250 = ssub.s32 %s22, 1
        %s251 = sand.u32 %s49, 1
        %s252 = scalar_lea.sflag [#allocation3], %s251
        %s253 = sand.u32 %s49, 1
        %s254 = smul.addr %s253, 8
        %s255 = scalar_lea.vmem [#allocation2], %s254
        // Predicated region
        $region33: #{tpu_custom_call.1} parent=31 // pred_check
          %p256 = pneg %p62
        $region34: #{tpu_custom_call.1} parent=31 // pred_check_branch
          %258 = sbr.rel (%p256) target = $region36
        $region35: #{tpu_custom_call.1} parent=31 // pred_region
          %260 = dma.done %s252, 128
        $region36: #{tpu_custom_call.1} parent=31 // pred_fallthru
          _
        // Predicated region
        $region37: #{tpu_custom_call.1} parent=31 // pred_check
          %p261 = pneg %p83
        $region38: #{tpu_custom_call.1} parent=31 // pred_check_branch
          %263 = sbr.rel (%p261) target = $region40
        $region39: #{tpu_custom_call.1} parent=31 // pred_region
          %265 = dma.done [#allocation6], 512
        $region40: #{tpu_custom_call.1} parent=31 // pred_fallthru
          _
        %s266 = sand.u32 %s49, 1
        %s267 = scalar_lea.sflag [#allocation3], %s266
        %s268 = sand.u32 %s49, 1
        %s269 = smul.addr %s268, 8
        %s270 = scalar_lea.vmem [#allocation2], %s269
        %p271 = pneg %p62
        %p272 = pneg %p59
        %p273 = pneg %p83
        %p274 = pneg %p80
        %p275 = pneg %p104
        %p276 = pneg %p101
        %p277 = pneg %p132
        %p278 = pneg %p129
        %s279 = sand.u32 %s119, 1
        %s280 = scalar_lea.sflag [#allocation4], %s279
        %s281 = sand.u32 %s119, 1
        %s282 = smul.addr %s281, 32
        %s283 = scalar_lea.vmem [#allocation7], %s282
        %p284 = pneg %p160
        %p285 = pneg %p157
        %s286 = sand.u32 %s27, 1
        %s287 = scalar_lea.sflag [#allocation9], %s286
        %s288 = sand.u32 %s147, 1
        %s289 = smul.addr %s288, 32
        %s290 = scalar_lea.vmem [#allocation8], %s289
        %p291 = pneg %p188
        %p292 = pneg %p185
        %s293 = sand.u32 %s27, 1
        %s294 = scalar_lea.sflag [#allocation9], %s293
        %s295 = sand.u32 %s175, 1
        %s296 = smul.addr %s295, 32
        %s297 = scalar_lea.vmem [#allocation10], %s296
        %v298 = vld [vmem:[%s255] sm:$0xff]
        %v299 = vld [vmem:[#allocation5] sm:$0xff]
        %v300 = vld [vmem:[#allocation5 + $0x8] sm:$0xff]
        %v301 = vld [vmem:[#allocation5 + $0x10] sm:$0xff]
        %v302 = vld [vmem:[#allocation5 + $0x18] sm:$0xff]
        %v303 = vld [vmem:[%s2] sm:$0x1]
        %v305 = vperm.slane %v303, 0
        %vm307 = vcmask 261120
        %v309 = vsel %vm307, %v298, 0
        %311 = vmatpush.msra.mxu0 0.0
        %312 = vmatpush.msra.mxu0 0.0
        %313 = vmatpush.msra.mxu0 0.0
        %314 = vmatpush.msra.mxu0 0.0
        %315 = vmatpush.msra.mxu0 0.0
        %316 = vmatpush.msra.mxu0 0.0
        %317 = vmatpush.msra.mxu0 0.0
        %318 = vmatpush.msra.mxu0 0.0
        %319 = vmatpush.msra.mxu0 0.0
        %320 = vmatpush.msra.mxu0 0.0
        %321 = vmatpush.msra.mxu0 0.0
        %322 = vmatpush.msra.mxu0 0.0
        %323 = vmatpush.msra.mxu0 %v302
        %324 = vmatpush.msra.mxu0 %v301
        %325 = vmatpush.msra.mxu0 %v300
        %326 = vmatpush.msra.mxu0 %v299
        %327 = vmatmul.f32.gmra.mxu0 %v309
        %v328 = vpop.f32.mrf.mxu0
        %v329 = vadd.f32 %v305, %v328
        %330 = vdwg.mxu0
        %v331 = vmul.f32 %v329, 0.35355338
        %vm332 = vcmask 64512
        %333 = vst.msk [vmem:[%s283] sm:$0xff] %vm332, %v331
        %335 = vrot.lane.b32.xlu0 %v329, 96
        %v336 = vpop.permute.xlu0 %335
        %338 = vst.msk [vmem:[%s290] sm:$0xff] %vm332, %v336
        %339 = vrot.lane.b32.xlu0 %v329, 64
        %v340 = vpop.permute.xlu0 %339
        %342 = vst.msk [vmem:[%s297] sm:$0xff] %vm332, %v340
        %344 = vrot.lane.b32.xlu0 %v331, 120
        %v345 = vpop.permute.xlu0 %344
        %s347 = scalar_lea.vmem %s283, 8 [#allocation7]
        %348 = vst.msk [vmem:[%s347] sm:$0xff] %vm332, %v345
        %349 = vrot.lane.b32.xlu0 %v329, 88
        %v350 = vpop.permute.xlu0 %349
        %s352 = scalar_lea.vmem %s290, 8 [#allocation8]
        %353 = vst.msk [vmem:[%s352] sm:$0xff] %vm332, %v350
        %354 = vrot.lane.b32.xlu0 %v329, 56
        %v355 = vpop.permute.xlu0 %354
        %s357 = scalar_lea.vmem %s297, 8 [#allocation10]
        %358 = vst.msk [vmem:[%s357] sm:$0xff] %vm332, %v355
        %359 = vrot.lane.b32.xlu0 %v331, 112
        %v360 = vpop.permute.xlu0 %359
        %s362 = scalar_lea.vmem %s283, 16 [#allocation7]
        %363 = vst.msk [vmem:[%s362] sm:$0xff] %vm332, %v360
        %364 = vrot.lane.b32.xlu0 %v329, 80
        %v365 = vpop.permute.xlu0 %364
        %s367 = scalar_lea.vmem %s290, 16 [#allocation8]
        %368 = vst.msk [vmem:[%s367] sm:$0xff] %vm332, %v365
        %369 = vrot.lane.b32.xlu0 %v329, 48
        %v370 = vpop.permute.xlu0 %369
        %s372 = scalar_lea.vmem %s297, 16 [#allocation10]
        %373 = vst.msk [vmem:[%s372] sm:$0xff] %vm332, %v370
        %374 = vrot.lane.b32.xlu0 %v331, 104
        %v375 = vpop.permute.xlu0 %374
        %s377 = scalar_lea.vmem %s283, 24 [#allocation7]
        %378 = vst.msk [vmem:[%s377] sm:$0xff] %vm332, %v375
        %379 = vrot.lane.b32.xlu0 %v329, 72
        %v380 = vpop.permute.xlu0 %379
        %s382 = scalar_lea.vmem %s290, 24 [#allocation8]
        %383 = vst.msk [vmem:[%s382] sm:$0xff] %vm332, %v380
        %384 = vrot.lane.b32.xlu0 %v329, 40
        %v385 = vpop.permute.xlu0 %384
        %s387 = scalar_lea.vmem %s297, 24 [#allocation10]
        %388 = vst.msk [vmem:[%s387] sm:$0xff] %vm332, %v385
        %s389 = sand.u32 %s119, 1
        %s390 = scalar_lea.sflag [#allocation4], %s389
        %s391 = sand.u32 %s119, 1
        %s392 = smul.addr %s391, 32
        %s393 = scalar_lea.vmem [#allocation7], %s392
        %s394 = sand.u32 %s27, 1
        %s395 = scalar_lea.sflag [#allocation9], %s394
        %s396 = sand.u32 %s147, 1
        %s397 = smul.addr %s396, 32
        %s398 = scalar_lea.vmem [#allocation8], %s397
        %s399 = sand.u32 %s27, 1
        %s400 = scalar_lea.sflag [#allocation9], %s399
        %s401 = sand.u32 %s175, 1
        %s402 = smul.addr %s401, 32
        %s403 = scalar_lea.vmem [#allocation10], %s402
        // Predicated region
        $region41: #{tpu_custom_call.1} parent=31 // pred_check
          %p404 = pneg %p129
        $region42: #{tpu_custom_call.1} parent=31 // pred_check_branch
          %406 = sbr.rel (%p404) target = $region44
        $region43: #{tpu_custom_call.1} parent=31 // pred_region
          %408 = vsyncadd %s390, 0
          %s409 = smul.addr %s31, 4
          %s410 = sadd.s32 %s32, %s409
          %s411 = smul.addr %s410, 8
          %s412 = scalar_lea.hbm %s3, %s411
          %s413 = sshll.u32 %s393, 4
          %s414 = int_to_ptr.vmem [resolvable:$true] %s413
          %s415 = sshll.u32 %s412, 4
          %s416 = int_to_ptr.hbm [resolvable:$true] %s415
          %421 = dma.vmem_to_hbm [thread:$0]  %s414, 512, %s416, %s390, 128, 128, 8
        $region44: #{tpu_custom_call.1} parent=31 // pred_fallthru
          _
        // Predicated region
        $region45: #{tpu_custom_call.1} parent=31 // pred_check
          %p422 = pneg %p157
        $region46: #{tpu_custom_call.1} parent=31 // pred_check_branch
          %424 = sbr.rel (%p422) target = $region48
        $region47: #{tpu_custom_call.1} parent=31 // pred_region
          %426 = vsyncadd %s395, 0
          %s427 = smul.addr %s31, 4
          %s428 = sadd.s32 %s32, %s427
          %s429 = smul.addr %s428, 8
          %s430 = scalar_lea.hbm %s4, %s429
          %s431 = sshll.u32 %s398, 4
          %s432 = int_to_ptr.vmem [resolvable:$true] %s431
          %s433 = sshll.u32 %s430, 4
          %s434 = int_to_ptr.hbm [resolvable:$true] %s433
          %439 = dma.vmem_to_hbm [thread:$0]  %s432, 512, %s434, %s395, 128, 128, 8
        $region48: #{tpu_custom_call.1} parent=31 // pred_fallthru
          _
        // Predicated region
        $region49: #{tpu_custom_call.1} parent=31 // pred_check
          %p440 = pneg %p185
        $region50: #{tpu_custom_call.1} parent=31 // pred_check_branch
          %442 = sbr.rel (%p440) target = $region52
        $region51: #{tpu_custom_call.1} parent=31 // pred_region
          %444 = vsyncadd %s400, 0
          %s445 = smul.addr %s31, 4
          %s446 = sadd.s32 %s32, %s445
          %s447 = smul.addr %s446, 8
          %s448 = scalar_lea.hbm %s5, %s447
          %s449 = sshll.u32 %s403, 4
          %s450 = int_to_ptr.vmem [resolvable:$true] %s449
          %s451 = sshll.u32 %s448, 4
          %s452 = int_to_ptr.hbm [resolvable:$true] %s451
          %457 = dma.vmem_to_hbm [thread:$0]  %s450, 512, %s452, %s400, 128, 128, 8
        $region52: #{tpu_custom_call.1} parent=31 // pred_fallthru
          _
      $region32: #{tpu_custom_call.1} parent=5 // pred_fallthru
        _
      %p458 = scmp.le.s32.totalorder 2, %s22
      // Predicated region
      $region53: #{tpu_custom_call.1} parent=5 // pred_check
        %p459 = pneg %p458
      $region54: #{tpu_custom_call.1} parent=5 // pred_check_branch
        %461 = sbr.rel (%p459) target = $region56
      $region55: #{tpu_custom_call.1} parent=5 // pred_region
        %s462 = ssub.s32 %s22, 2
        // Predicated region
        $region57: #{tpu_custom_call.1} parent=55 // pred_check
          %p463 = pneg %p135
        $region58: #{tpu_custom_call.1} parent=55 // pred_check_branch
          %465 = sbr.rel (%p463) target = $region60
        $region59: #{tpu_custom_call.1} parent=55 // pred_region
          %s466 = sand.u32 %s120, 1
          %s467 = scalar_lea.sflag [#allocation4], %s466
          %s468 = sand.u32 %s120, 1
          %s469 = smul.addr %s468, 32
          %s470 = scalar_lea.vmem [#allocation7], %s469
          %472 = dma.done %s467, 512
        $region60: #{tpu_custom_call.1} parent=55 // pred_fallthru
          _
        // Predicated region
        $region61: #{tpu_custom_call.1} parent=55 // pred_check
          %p473 = pneg %p163
        $region62: #{tpu_custom_call.1} parent=55 // pred_check_branch
          %475 = sbr.rel (%p473) target = $region64
        $region63: #{tpu_custom_call.1} parent=55 // pred_region
          %s476 = sand.u32 %s28, 1
          %s477 = scalar_lea.sflag [#allocation9], %s476
          %s478 = sand.u32 %s148, 1
          %s479 = smul.addr %s478, 32
          %s480 = scalar_lea.vmem [#allocation8], %s479
          %482 = dma.done %s477, 512
        $region64: #{tpu_custom_call.1} parent=55 // pred_fallthru
          _
        // Predicated region
        $region65: #{tpu_custom_call.1} parent=55 // pred_check
          %p483 = pneg %p191
        $region66: #{tpu_custom_call.1} parent=55 // pred_check_branch
          %485 = sbr.rel (%p483) target = $region68
        $region67: #{tpu_custom_call.1} parent=55 // pred_region
          %s486 = sand.u32 %s28, 1
          %s487 = scalar_lea.sflag [#allocation9], %s486
          %s488 = sand.u32 %s176, 1
          %s489 = smul.addr %s488, 32
          %s490 = scalar_lea.vmem [#allocation10], %s489
          %492 = dma.done %s487, 512
        $region68: #{tpu_custom_call.1} parent=55 // pred_fallthru
          _
      $region56: #{tpu_custom_call.1} parent=5 // pred_fallthru
        _
    $region6: #{tpu_custom_call.1} parent=1 // loop_footer
      %s26 = sadd.s32 1, %s22
    $region7: #{tpu_custom_call.1} parent=1 // loop_footer_branch
      %21 = sbr.rel target = $region3
    $region8: #{tpu_custom_call.1} parent=1 // loop_exit
      _
    %493 = vsyncpa [#allocation3], 1
    %s494 = scalar_lea.sflag [#allocation3], 1
    %495 = vsyncpa %s494, 1
    %496 = vsyncpa [#allocation6], 1
    %497 = vsyncpa [#allocation4], 1
    %s498 = scalar_lea.sflag [#allocation4], 1
    %499 = vsyncpa %s498, 1
    %500 = vsyncpa [#allocation9], 1
    %s501 = scalar_lea.sflag [#allocation9], 1
    %502 = vsyncpa %s501, 1

</llo_original>
